<compile_context>
chip_gen: v7x
topology: tpu7x:2x2x1
jax: 0.10.0
libtpu: 0.0.40
codegen_flags: <defaults>
</compile_context>

<pallas_src>
import numpy as np
import jax
import jax.numpy as jnp
from jax.experimental import pallas as pl
from jax.experimental.pallas import tpu as pltpu

# ---- small, lane-friendly demo dims (multiples of 8 / 128) ----
B, S = 2, 8              # batch, sequence  -> M = B*S = 16 rows
D_MODEL = 128            # d_model
D_FF = 256               # d_ff


def _round_up(x, n):
    return -(-x // n) * n


# ---------------- Pallas kernel ----------------

def ffn_kernel(x_ref, w1_ref, b1_ref, w2_ref, b2_ref, o_ref, acc_ref):
    """Grid = (row tiles [parallel], d_ff chunks [arbitrary, reduction])."""
    j = pl.program_id(1)

    @pl.when(j == 0)
    def _():
        acc_ref[...] = jnp.zeros_like(acc_ref)

    # Linear 1 for this d_ff chunk: bf16 MXU operands, f32 accumulation, f32 bias.
    h = jnp.dot(x_ref[...], w1_ref[...],
                preferred_element_type=jnp.float32) + b1_ref[...]
    h = jnp.maximum(h, 0.0)                       # ReLU in f32 (VPU)

    # TODO(synk): dropout is identity (eval mode); training-mode dropout would need an
    # in-kernel pltpu.prng_seed / prng_random_bits mask.

    # Linear 2 partial product, accumulated over d_ff chunks in f32 VMEM scratch.
    acc_ref[...] += jnp.dot(h.astype(jnp.bfloat16), w2_ref[...],
                            preferred_element_type=jnp.float32)

    @pl.when(j == pl.num_programs(1) - 1)
    def _():
        o_ref[...] = (acc_ref[...] + b2_ref[...]).astype(o_ref.dtype)


# ---------------- wrapper ----------------

def positionwise_ffn(x, w1, b1, w2, b2, *, block_m=None, block_f=None, out_dtype=None):
    """x: (..., d_model); w1:(d_model,d_ff), w2:(d_ff,d_model); b1:(d_ff,)/(1,d_ff), b2 alike."""
    orig_shape = x.shape
    out_dtype = x.dtype if out_dtype is None else out_dtype
    d_model = orig_shape[-1]
    d_ff = w1.shape[1]
    m = int(np.prod(orig_shape[:-1]))             # fold all leading dims -> rows

    # bf16 activations + weights at the kernel boundary (half the DMA bytes);
    # biases stay f32 and are added after the f32 accumulation.
    x2 = x.reshape(m, d_model).astype(jnp.bfloat16)
    w1 = w1.astype(jnp.bfloat16)
    w2 = w2.astype(jnp.bfloat16)
    b1 = jnp.asarray(b1, jnp.float32).reshape(1, d_ff)
    b2 = jnp.asarray(b2, jnp.float32).reshape(1, d_model)

    # Row tiling: 512-row tiles for large M (>=2 grid steps, ~85% of HBM roofline,
    # multiple of the 256-row MXU pass); small M -> a single tile padded to /8 sublanes.
    if block_m is None:
        block_m = 512 if m >= 1024 else _round_up(m, 8)
    m_pad = _round_up(m, block_m)
    if m_pad != m:                                 # ragged last tile -> zero-pad rows
        x2 = jnp.pad(x2, ((0, m_pad - m), (0, 0)))

    # d_ff chunking keeps the (block_m, block_f) intermediate bounded.
    if block_f is None:
        block_f = d_ff if d_ff <= 1024 else 512
        if d_ff % block_f != 0:
            block_f = d_ff
    assert d_ff % block_f == 0
    n_f = d_ff // block_f

    # When the weights have a constant index map (single d_ff chunk) they are resident:
    # single-buffer them so no VMEM is spent on a double buffer that never refills.
    w_pipe = pl.Buffered(1) if n_f == 1 else None

    out = pl.pallas_call(
        ffn_kernel,
        out_shape=jax.ShapeDtypeStruct((m_pad, d_model), out_dtype),
        grid=(m_pad // block_m, n_f),
        in_specs=[
            pl.BlockSpec((block_m, d_model), lambda i, j: (i, 0)),                  # x rows
            pl.BlockSpec((d_model, block_f), lambda i, j: (0, j),
                         pipeline_mode=w_pipe),                                     # w1 chunk
            pl.BlockSpec((1, block_f), lambda i, j: (0, j)),                        # b1 chunk
            pl.BlockSpec((block_f, d_model), lambda i, j: (j, 0),
                         pipeline_mode=w_pipe),                                     # w2 chunk
            pl.BlockSpec((1, d_model), lambda i, j: (0, 0)),                        # b2
        ],
        out_specs=pl.BlockSpec((block_m, d_model), lambda i, j: (i, 0)),
        scratch_shapes=[pltpu.VMEM((block_m, d_model), jnp.float32)],               # f32 acc
        compiler_params=pltpu.CompilerParams(
            dimension_semantics=("parallel", "arbitrary"),   # rows sharded, d_ff reduced
            vmem_limit_bytes=32 * 1024 * 1024),
    )(x2, w1, b1, w2, b2)

    return out[:m].reshape(orig_shape[:-1] + (d_model,))


# ---------------- demo / correctness check ----------------

if __name__ == "__main__":
    key = jax.random.PRNGKey(0)
    kx, k1, k2, kb1, kb2 = jax.random.split(key, 5)

    scale = 0.02
    x = jax.random.normal(kx, (B, S, D_MODEL), jnp.float32)
    w1 = jax.random.normal(k1, (D_MODEL, D_FF), jnp.float32) * scale
    w2 = jax.random.normal(k2, (D_FF, D_MODEL), jnp.float32) * scale
    b1 = jax.random.normal(kb1, (1, D_FF), jnp.float32) * scale
    b2 = jax.random.normal(kb2, (1, D_MODEL), jnp.float32) * scale

    fwd = jax.jit(positionwise_ffn)
    out = fwd(x, w1, b1, w2, b2)
    jax.block_until_ready(out)

    # Pure-JAX reference with identical precision choices (bf16 MXU operands, f32 acc).
    xb = x.reshape(-1, D_MODEL).astype(jnp.bfloat16)
    h = jnp.dot(xb, w1.astype(jnp.bfloat16), preferred_element_type=jnp.float32) + b1
    h = jnp.maximum(h, 0.0)
    ref = (jnp.dot(h.astype(jnp.bfloat16), w2.astype(jnp.bfloat16),
                   preferred_element_type=jnp.float32) + b2).reshape(B, S, D_MODEL)

    assert out.shape == (B, S, D_MODEL) and out.dtype == jnp.float32
    assert bool(jnp.all(jnp.isfinite(out)))
    np.testing.assert_allclose(np.asarray(out), np.asarray(ref), rtol=1e-2, atol=1e-3)
    print("KERNEL_OK")
</pallas_src>

<mosaic_0001>
module attributes {stable_mosaic.version = 11 : i64} {
  func.func @ffn_kernel(%arg0: i32, %arg1: i32, %arg2: memref<16x128xbf16, #tpu.memory_space<vmem>>, %arg3: memref<128x256xbf16, #tpu.memory_space<vmem>>, %arg4: memref<1x256xf32, #tpu.memory_space<vmem>>, %arg5: memref<256x128xbf16, #tpu.memory_space<vmem>>, %arg6: memref<1x128xf32, #tpu.memory_space<vmem>>, %arg7: memref<16x128xf32, #tpu.memory_space<vmem>>, %arg8: memref<16x128xf32, #tpu.memory_space<vmem>>) attributes {dimension_semantics = [#tpu.dimension_semantics<parallel>, #tpu.dimension_semantics<arbitrary>], iteration_bounds = array<i64: 1, 1>, scalar_prefetch = 0 : i64, scratch_operands = 1 : i64, tpu.core_type = #tpu.core_type<tc>, window_params = [{transform_indices = @transform_0, window_bounds = array<i64: 16, 128>}, {pipeline_mode = #tpu.pipeline_mode<synchronous>, transform_indices = @transform_1, window_bounds = array<i64: 128, 256>}, {transform_indices = @transform_2, window_bounds = array<i64: 1, 256>}, {pipeline_mode = #tpu.pipeline_mode<synchronous>, transform_indices = @transform_3, window_bounds = array<i64: 256, 128>}, {pipeline_mode = #tpu.pipeline_mode<synchronous>, transform_indices = @transform_4, window_bounds = array<i64: 1, 128>}, {transform_indices = @transform_5, window_bounds = array<i64: 16, 128>}]} {
    %c0_i32 = arith.constant 0 : i32
    %0 = arith.cmpi eq, %arg1, %c0_i32 : i32
    %1 = arith.extui %0 : i1 to i32
    %c0_i32_0 = arith.constant 0 : i32
    %2 = arith.cmpi ne, %1, %c0_i32_0 : i32
    scf.if %2 {
      %cst_16 = arith.constant 0.000000e+00 : f32
      %20 = vector.broadcast %cst_16 : f32 to vector<16x128xf32>
      %c0_17 = arith.constant 0 : index
      %c0_18 = arith.constant 0 : index
      %21 = vector.load %arg8[%c0_17, %c0_18] : memref<16x128xf32, #tpu.memory_space<vmem>>, vector<16x128xf32>
      tpu.vector_store %arg8[%c0_17, %c0_18], %20 {strides = array<i32>} : memref<16x128xf32, #tpu.memory_space<vmem>>, vector<16x128xf32>,
    } else {
    }
    %c0 = arith.constant 0 : index
    %c0_1 = arith.constant 0 : index
    %3 = vector.load %arg2[%c0, %c0_1] : memref<16x128xbf16, #tpu.memory_space<vmem>>, vector<16x128xbf16>
    %c0_2 = arith.constant 0 : index
    %c0_3 = arith.constant 0 : index
    %4 = vector.load %arg3[%c0_2, %c0_3] : memref<128x256xbf16, #tpu.memory_space<vmem>>, vector<128x256xbf16>
    %cst = arith.constant dense<0.000000e+00> : vector<16x256xf32>
    %5 = tpu.matmul %3, %4, %cst {dimension_numbers = #tpu.dot_dimension_numbers<[1], [0], [0], [1], [0, 0, 1, 1], [], []>} : vector<16x128xbf16>, vector<128x256xbf16>, vector<16x256xf32> -> vector<16x256xf32>
    %c0_4 = arith.constant 0 : index
    %c0_5 = arith.constant 0 : index
    %6 = vector.load %arg4[%c0_4, %c0_5] : memref<1x256xf32, #tpu.memory_space<vmem>>, vector<1x256xf32>
    %7 = vector.broadcast %6 : vector<1x256xf32> to vector<16x256xf32>
    %8 = arith.addf %5, %7 : vector<16x256xf32>
    %cst_6 = arith.constant 0.000000e+00 : f32
    %9 = vector.broadcast %cst_6 : f32 to vector<16x256xf32>
    %10 = arith.maximumf %8, %9 : vector<16x256xf32>
    %c0_7 = arith.constant 0 : index
    %c0_8 = arith.constant 0 : index
    %11 = vector.load %arg8[%c0_7, %c0_8] : memref<16x128xf32, #tpu.memory_space<vmem>>, vector<16x128xf32>
    %12 = arith.truncf %10 : vector<16x256xf32> to vector<16x256xbf16>
    %c0_9 = arith.constant 0 : index
    %c0_10 = arith.constant 0 : index
    %13 = vector.load %arg5[%c0_9, %c0_10] : memref<256x128xbf16, #tpu.memory_space<vmem>>, vector<256x128xbf16>
    %cst_11 = arith.constant dense<0.000000e+00> : vector<16x128xf32>
    %14 = tpu.matmul %12, %13, %cst_11 {dimension_numbers = #tpu.dot_dimension_numbers<[1], [0], [0], [1], [0, 0, 1, 1], [], []>} : vector<16x256xbf16>, vector<256x128xbf16>, vector<16x128xf32> -> vector<16x128xf32>
    %15 = arith.addf %11, %14 : vector<16x128xf32>
    %c0_12 = arith.constant 0 : index
    %c0_13 = arith.constant 0 : index
    %16 = vector.load %arg8[%c0_12, %c0_13] : memref<16x128xf32, #tpu.memory_space<vmem>>, vector<16x128xf32>
    tpu.vector_store %arg8[%c0_12, %c0_13], %15 {strides = array<i32>} : memref<16x128xf32, #tpu.memory_space<vmem>>, vector<16x128xf32>,
    %c0_i32_14 = arith.constant 0 : i32
    %17 = arith.cmpi eq, %arg1, %c0_i32_14 : i32
    %18 = arith.extui %17 : i1 to i32
    %c0_i32_15 = arith.constant 0 : i32
    %19 = arith.cmpi ne, %18, %c0_i32_15 : i32
    scf.if %19 {
      %c0_16 = arith.constant 0 : index
      %c0_17 = arith.constant 0 : index
      %20 = vector.load %arg8[%c0_16, %c0_17] : memref<16x128xf32, #tpu.memory_space<vmem>>, vector<16x128xf32>
      %c0_18 = arith.constant 0 : index
      %c0_19 = arith.constant 0 : index
      %21 = vector.load %arg6[%c0_18, %c0_19] : memref<1x128xf32, #tpu.memory_space<vmem>>, vector<1x128xf32>
      %22 = vector.broadcast %21 : vector<1x128xf32> to vector<16x128xf32>
      %23 = arith.addf %20, %22 : vector<16x128xf32>
      %c0_20 = arith.constant 0 : index
      %c0_21 = arith.constant 0 : index
      %24 = vector.load %arg7[%c0_20, %c0_21] : memref<16x128xf32, #tpu.memory_space<vmem>>, vector<16x128xf32>
      tpu.vector_store %arg7[%c0_20, %c0_21], %23 {strides = array<i32>} : memref<16x128xf32, #tpu.memory_space<vmem>>, vector<16x128xf32>,
    } else {
    }
    return
  }
  func.func @transform_0(%arg0: i32, %arg1: i32) -> (i32, i32) {
    %c0_i32 = arith.constant 0 : i32
    %c0_i32_0 = arith.constant 0 : i32
    return %arg0, %c0_i32 : i32, i32
  }
  func.func @transform_1(%arg0: i32, %arg1: i32) -> (i32, i32) {
    %c0_i32 = arith.constant 0 : i32
    %c0_i32_0 = arith.constant 0 : i32
    return %c0_i32, %arg1 : i32, i32
  }
  func.func @transform_2(%arg0: i32, %arg1: i32) -> (i32, i32) {
    %c0_i32 = arith.constant 0 : i32
    %c0_i32_0 = arith.constant 0 : i32
    return %c0_i32, %arg1 : i32, i32
  }
  func.func @transform_3(%arg0: i32, %arg1: i32) -> (i32, i32) {
    %c0_i32 = arith.constant 0 : i32
    %c0_i32_0 = arith.constant 0 : i32
    return %arg1, %c0_i32 : i32, i32
  }
  func.func @transform_4(%arg0: i32, %arg1: i32) -> (i32, i32) {
    %c0_i32 = arith.constant 0 : i32
    %c0_i32_0 = arith.constant 0 : i32
    %c0_i32_1 = arith.constant 0 : i32
    return %c0_i32, %c0_i32_0 : i32, i32
  }
  func.func @transform_5(%arg0: i32, %arg1: i32) -> (i32, i32) {
    %c0_i32 = arith.constant 0 : i32
    %c0_i32_0 = arith.constant 0 : i32
    return %arg0, %c0_i32 : i32, i32
  }
}

</mosaic_0001>

<llo_original>
// kernel: positionwise_ffn.1
$region0: #{positionwise_ffn.1}
  #allocation0 [shape = 'u32[]', space=smem, size = 0x4, offset = 0x4, fixed_abs, tag = 'smem constant byte address 0x4 - core index']
  #allocation1 [shape = 'u32[144,128]{1,0:T(1,128)}', space=vmem, size = 0x12000, scoped, tag = 'internal scratch']
  #allocation2 [shape = 'f32[16,128]{1,0:T(8,128)}', space=vmem, size = 0x2000, scoped, tag = 'scratch operand']
  %s0 = inlined_call_operand.vmem [shape: bf16[16,128], index: 0, kind: input, shape index: {}]
  %s1 = inlined_call_operand.vmem [shape: bf16[128,256], index: 1, kind: input, shape index: {}]
  %s2 = inlined_call_operand.vmem [shape: f32[1,256], index: 2, kind: input, shape index: {}]
  %s3 = inlined_call_operand.vmem [shape: bf16[256,128], index: 3, kind: input, shape index: {}]
  %s4 = inlined_call_operand.vmem [shape: f32[1,128], index: 4, kind: input, shape index: {}]
  %s5 = inlined_call_operand.hbm [shape: f32[16,128], index: 5, kind: output, shape index: {}]
  %s6 = sld [smem:[#allocation0]]
  $region38: #{positionwise_ffn.1} parent=0
    _
  %s8 = ssub.s32 1, %s6
  %s9 = scalar_select 0, %s8, %s6
  $region1: #{positionwise_ffn.1} parent=0
    #allocation3 [shape = 'u8[8192]{0}', space=vmem, size = 0x2000, scoped, tag = 'output window, operand 0, single buffered']
    #allocation4 [shape = 's32[1]{0}', space=sflag, size = 0x4, scoped, tag = 'scoped memory for positionwise_ffn.1']
    %10 = vsyncpa [#allocation4], 0
    // Predicated region
    $region2: #{positionwise_ffn.1} parent=1 // pred_check
      _
    $region3: #{positionwise_ffn.1} parent=1 // pred_check_branch
      %12 = sbr.rel (0) target = $region5
    $region4: #{positionwise_ffn.1} parent=1 // pred_region
      _
    $region5: #{positionwise_ffn.1} parent=1 // pred_fallthru
      _
    // Predicated region
    $region6: #{positionwise_ffn.1} parent=1 // pred_check
      _
    $region7: #{positionwise_ffn.1} parent=1 // pred_check_branch
      %14 = sbr.rel (0) target = $region9
    $region8: #{positionwise_ffn.1} parent=1 // pred_region
      _
    $region9: #{positionwise_ffn.1} parent=1 // pred_fallthru
      _
    // Predicated region
    $region10: #{positionwise_ffn.1} parent=1 // pred_check
      _
    $region11: #{positionwise_ffn.1} parent=1 // pred_check_branch
      %16 = sbr.rel (0) target = $region13
    $region12: #{positionwise_ffn.1} parent=1 // pred_region
      _
    $region13: #{positionwise_ffn.1} parent=1 // pred_fallthru
      _
    // Predicated region
    $region14: #{positionwise_ffn.1} parent=1 // pred_check
      _
    $region15: #{positionwise_ffn.1} parent=1 // pred_check_branch
      %18 = sbr.rel (0) target = $region17
    $region16: #{positionwise_ffn.1} parent=1 // pred_region
      _
    $region17: #{positionwise_ffn.1} parent=1 // pred_fallthru
      _
    // Predicated region
    $region18: #{positionwise_ffn.1} parent=1 // pred_check
      _
    $region19: #{positionwise_ffn.1} parent=1 // pred_check_branch
      %20 = sbr.rel (0) target = $region21
    $region20: #{positionwise_ffn.1} parent=1 // pred_region
      _
    $region21: #{positionwise_ffn.1} parent=1 // pred_fallthru
      _
    %p22 = scmp.eq.s32.totalorder 0, 0
    // Predicated region
    $region22: #{positionwise_ffn.1} parent=1 // pred_check
      %p23 = pneg %p22
    $region23: #{positionwise_ffn.1} parent=1 // pred_check_branch
      %25 = sbr.rel (%p23) target = $region25
    $region24: #{positionwise_ffn.1} parent=1 // pred_region
      %26 = vst [vmem:[#allocation2] sm:$0xff] 0.0
      %27 = vst [vmem:[#allocation2 + $0x8] sm:$0xff] 0.0
    $region25: #{positionwise_ffn.1} parent=1 // pred_fallthru
      _
    %v28 = vld [vmem:[%s0] sm:$0xf]
    %v29 = vld [vmem:[%s0 + $0x4] sm:$0xf]
    %v30 = vld [vmem:[%s1] sm:$0xff]
    %v31 = vld [vmem:[%s1 + $0x8] sm:$0xff]
    %v32 = vld [vmem:[%s1 + $0x10] sm:$0xff]
    %v33 = vld [vmem:[%s1 + $0x18] sm:$0xff]
    %v34 = vld [vmem:[%s1 + $0x20] sm:$0xff]
    %v35 = vld [vmem:[%s1 + $0x28] sm:$0xff]
    %v36 = vld [vmem:[%s1 + $0x30] sm:$0xff]
    %v37 = vld [vmem:[%s1 + $0x38] sm:$0xff]
    %v38 = vld [vmem:[%s1 + $0x40] sm:$0xff]
    %v39 = vld [vmem:[%s1 + $0x48] sm:$0xff]
    %v40 = vld [vmem:[%s1 + $0x50] sm:$0xff]
    %v41 = vld [vmem:[%s1 + $0x58] sm:$0xff]
    %v42 = vld [vmem:[%s1 + $0x60] sm:$0xff]
    %v43 = vld [vmem:[%s1 + $0x68] sm:$0xff]
    %v44 = vld [vmem:[%s1 + $0x70] sm:$0xff]
    %v45 = vld [vmem:[%s1 + $0x78] sm:$0xff]
    %v46 = vld [vmem:[%s2] sm:$0x3]
    %v48 = vlaneseq
    %v49 = vshrl.u32 %v48, 7
    %v50 = vsub.s32 0, %v49
    %v51 = vrot.slane %v46, %v50
    %v52 = vlaneseq
    %v53 = vshrl.u32 %v52, 7
    %v54 = vsub.s32 1, %v53
    %v55 = vrot.slane %v46, %v54
    %v60 = vunpack.c.l.b16 %v28
    %v61 = vunpack.c.l.b16 %v29
    %v62 = vpack.c.b16 %v61, %v60
    %v80 = vunpack.c.l.b16 %v30
    %v81 = vunpack.c.h.b16 %v30
    %v82 = vunpack.c.l.b16 %v31
    %v83 = vunpack.c.h.b16 %v31
    %v84 = vunpack.c.l.b16 %v32
    %v85 = vunpack.c.h.b16 %v32
    %v86 = vunpack.c.l.b16 %v33
    %v87 = vunpack.c.h.b16 %v33
    %v88 = vunpack.c.l.b16 %v34
    %v89 = vunpack.c.h.b16 %v34
    %v90 = vunpack.c.l.b16 %v35
    %v91 = vunpack.c.h.b16 %v35
    %v92 = vunpack.c.l.b16 %v36
    %v93 = vunpack.c.h.b16 %v36
    %v94 = vunpack.c.l.b16 %v37
    %v95 = vunpack.c.h.b16 %v37
    %v96 = vunpack.c.l.b16 %v38
    %v97 = vunpack.c.h.b16 %v38
    %v98 = vunpack.c.l.b16 %v39
    %v99 = vunpack.c.h.b16 %v39
    %v100 = vunpack.c.l.b16 %v40
    %v101 = vunpack.c.h.b16 %v40
    %v102 = vunpack.c.l.b16 %v41
    %v103 = vunpack.c.h.b16 %v41
    %v104 = vunpack.c.l.b16 %v42
    %v105 = vunpack.c.h.b16 %v42
    %v106 = vunpack.c.l.b16 %v43
    %v107 = vunpack.c.h.b16 %v43
    %v108 = vunpack.c.l.b16 %v44
    %v109 = vunpack.c.h.b16 %v44
    %v110 = vunpack.c.l.b16 %v45
    %v111 = vunpack.c.h.b16 %v45
    %v112 = vpack.c.b16 %v82, %v80
    %v113 = vpack.c.b16 %v83, %v81
    %v114 = vpack.c.b16 %v86, %v84
    %v115 = vpack.c.b16 %v87, %v85
    %v116 = vpack.c.b16 %v90, %v88
    %v117 = vpack.c.b16 %v91, %v89
    %v118 = vpack.c.b16 %v94, %v92
    %v119 = vpack.c.b16 %v95, %v93
    %v120 = vpack.c.b16 %v98, %v96
    %v121 = vpack.c.b16 %v99, %v97
    %v122 = vpack.c.b16 %v102, %v100
    %v123 = vpack.c.b16 %v103, %v101
    %v124 = vpack.c.b16 %v106, %v104
    %v125 = vpack.c.b16 %v107, %v105
    %v126 = vpack.c.b16 %v110, %v108
    %v127 = vpack.c.b16 %v111, %v109
    %144 = vmatprep.subr.bf16.mxu0 %v113
    %145 = vmatpush1.bf16.msra.mxu0 %v112
    %146 = vmatprep.subr.bf16.mxu0 %v115
    %147 = vmatpush1.bf16.msra.mxu0 %v114
    %148 = vmatprep.subr.bf16.mxu0 %v117
    %149 = vmatpush1.bf16.msra.mxu0 %v116
    %150 = vmatprep.subr.bf16.mxu0 %v119
    %151 = vmatpush1.bf16.msra.mxu0 %v118
    %152 = vmatprep.subr.bf16.mxu0 %v121
    %153 = vmatpush1.bf16.msra.mxu0 %v120
    %154 = vmatprep.subr.bf16.mxu0 %v123
    %155 = vmatpush1.bf16.msra.mxu0 %v122
    %156 = vmatprep.subr.bf16.mxu0 %v125
    %157 = vmatpush1.bf16.msra.mxu0 %v124
    %158 = vmatprep.subr.bf16.mxu0 %v127
    %159 = vmatpush1.bf16.msra.mxu0 %v126
    %160 = vmatprep.subr.bf16.mxu0 0
    %161 = vmatpush1.bf16.msra.mxu0 0
    %162 = vmatprep.subr.bf16.mxu0 0
    %163 = vmatpush1.bf16.msra.mxu0 0
    %164 = vmatprep.subr.bf16.mxu0 0
    %165 = vmatpush1.bf16.msra.mxu0 0
    %166 = vmatprep.subr.bf16.mxu0 0
    %167 = vmatpush1.bf16.msra.mxu0 0
    %168 = vmatprep.subr.bf16.mxu0 0
    %169 = vmatpush1.bf16.msra.mxu0 0
    %170 = vmatprep.subr.bf16.mxu0 0
    %171 = vmatpush1.bf16.msra.mxu0 0
    %172 = vmatprep.subr.bf16.mxu0 0
    %173 = vmatpush1.bf16.msra.mxu0 0
    %174 = vmatprep.subr.bf16.mxu0 0
    %175 = vmatpush1.bf16.msra.mxu0 0
    %176 = vmatprep.mubr.bf16.mxu0 0
    %177 = vmatmul.mubr.bf16.gmra.mrb[0].mxu0 %v62
    %v178 = vpop.f32.mrb[0].mxu0
    %v179 = vadd.f32 %v51, %v178
    %v180 = vpop.f32.mrb[0].mxu0
    %v181 = vadd.f32 %v55, %v180
    %v182 = vpop.f32.mrb[0].mxu0
    %v183 = vadd.f32 %v51, %v182
    %v184 = vpop.f32.mrb[0].mxu0
    %v185 = vadd.f32 %v55, %v184
    %186 = vdwg.mxu0
    %v187 = vmax.f32 %v179, 0.0
    %v188 = vmax.f32 %v181, 0.0
    %v189 = vmax.f32 %v183, 0.0
    %v190 = vmax.f32 %v185, 0.0
    %v191 = vld [vmem:[#allocation2] sm:$0xff]
    %v192 = vld [vmem:[#allocation2 + $0x8] sm:$0xff]
    %v193 = vpack.c.bf16 %v189, %v187
    %v194 = vpack.c.bf16 %v190, %v188
    %v195 = vld [vmem:[%s3] sm:$0xf]
    %v196 = vld [vmem:[%s3 + $0x4] sm:$0xf]
    %v197 = vld [vmem:[%s3 + $0x8] sm:$0xf]
    %v198 = vld [vmem:[%s3 + $0xc] sm:$0xf]
    %v199 = vld [vmem:[%s3 + $0x10] sm:$0xf]
    %v200 = vld [vmem:[%s3 + $0x14] sm:$0xf]
    %v201 = vld [vmem:[%s3 + $0x18] sm:$0xf]
    %v202 = vld [vmem:[%s3 + $0x1c] sm:$0xf]
    %v203 = vld [vmem:[%s3 + $0x20] sm:$0xf]
    %v204 = vld [vmem:[%s3 + $0x24] sm:$0xf]
    %v205 = vld [vmem:[%s3 + $0x28] sm:$0xf]
    %v206 = vld [vmem:[%s3 + $0x2c] sm:$0xf]
    %v207 = vld [vmem:[%s3 + $0x30] sm:$0xf]
    %v208 = vld [vmem:[%s3 + $0x34] sm:$0xf]
    %v209 = vld [vmem:[%s3 + $0x38] sm:$0xf]
    %v210 = vld [vmem:[%s3 + $0x3c] sm:$0xf]
    %v211 = vld [vmem:[%s3 + $0x40] sm:$0xf]
    %v212 = vld [vmem:[%s3 + $0x44] sm:$0xf]
    %v213 = vld [vmem:[%s3 + $0x48] sm:$0xf]
    %v214 = vld [vmem:[%s3 + $0x4c] sm:$0xf]
    %v215 = vld [vmem:[%s3 + $0x50] sm:$0xf]
    %v216 = vld [vmem:[%s3 + $0x54] sm:$0xf]
    %v217 = vld [vmem:[%s3 + $0x58] sm:$0xf]
    %v218 = vld [vmem:[%s3 + $0x5c] sm:$0xf]
    %v219 = vld [vmem:[%s3 + $0x60] sm:$0xf]
    %v220 = vld [vmem:[%s3 + $0x64] sm:$0xf]
    %v221 = vld [vmem:[%s3 + $0x68] sm:$0xf]
    %v222 = vld [vmem:[%s3 + $0x6c] sm:$0xf]
    %v223 = vld [vmem:[%s3 + $0x70] sm:$0xf]
    %v224 = vld [vmem:[%s3 + $0x74] sm:$0xf]
    %v225 = vld [vmem:[%s3 + $0x78] sm:$0xf]
    %v226 = vld [vmem:[%s3 + $0x7c] sm:$0xf]
    %v259 = vunpack.c.l.b16 %v195
    %v260 = vunpack.c.l.b16 %v196
    %v261 = vunpack.c.l.b16 %v197
    %v262 = vunpack.c.l.b16 %v198
    %v263 = vunpack.c.l.b16 %v199
    %v264 = vunpack.c.l.b16 %v200
    %v265 = vunpack.c.l.b16 %v201
    %v266 = vunpack.c.l.b16 %v202
    %v267 = vunpack.c.l.b16 %v203
    %v268 = vunpack.c.l.b16 %v204
    %v269 = vunpack.c.l.b16 %v205
    %v270 = vunpack.c.l.b16 %v206
    %v271 = vunpack.c.l.b16 %v207
    %v272 = vunpack.c.l.b16 %v208
    %v273 = vunpack.c.l.b16 %v209
    %v274 = vunpack.c.l.b16 %v210
    %v275 = vunpack.c.l.b16 %v211
    %v276 = vunpack.c.l.b16 %v212
    %v277 = vunpack.c.l.b16 %v213
    %v278 = vunpack.c.l.b16 %v214
    %v279 = vunpack.c.l.b16 %v215
    %v280 = vunpack.c.l.b16 %v216
    %v281 = vunpack.c.l.b16 %v217
    %v282 = vunpack.c.l.b16 %v218
    %v283 = vunpack.c.l.b16 %v219
    %v284 = vunpack.c.l.b16 %v220
    %v285 = vunpack.c.l.b16 %v221
    %v286 = vunpack.c.l.b16 %v222
    %v287 = vunpack.c.l.b16 %v223
    %v288 = vunpack.c.l.b16 %v224
    %v289 = vunpack.c.l.b16 %v225
    %v290 = vunpack.c.l.b16 %v226
    %v291 = vpack.c.b16 %v260, %v259
    %v292 = vpack.c.b16 %v262, %v261
    %v293 = vpack.c.b16 %v264, %v263
    %v294 = vpack.c.b16 %v266, %v265
    %v295 = vpack.c.b16 %v268, %v267
    %v296 = vpack.c.b16 %v270, %v269
    %v297 = vpack.c.b16 %v272, %v271
    %v298 = vpack.c.b16 %v274, %v273
    %v299 = vpack.c.b16 %v276, %v275
    %v300 = vpack.c.b16 %v278, %v277
    %v301 = vpack.c.b16 %v280, %v279
    %v302 = vpack.c.b16 %v282, %v281
    %v303 = vpack.c.b16 %v284, %v283
    %v304 = vpack.c.b16 %v286, %v285
    %v305 = vpack.c.b16 %v288, %v287
    %v306 = vpack.c.b16 %v290, %v289
    %323 = vmatprep.subr.bf16.mxu0 0
    %324 = vmatpush1.bf16.msra.mxu0 %v291
    %325 = vmatprep.subr.bf16.mxu0 0
    %326 = vmatpush1.bf16.msra.mxu0 %v292
    %327 = vmatprep.subr.bf16.mxu0 0
    %328 = vmatpush1.bf16.msra.mxu0 %v293
    %329 = vmatprep.subr.bf16.mxu0 0
    %330 = vmatpush1.bf16.msra.mxu0 %v294
    %331 = vmatprep.subr.bf16.mxu0 0
    %332 = vmatpush1.bf16.msra.mxu0 %v295
    %333 = vmatprep.subr.bf16.mxu0 0
    %334 = vmatpush1.bf16.msra.mxu0 %v296
    %335 = vmatprep.subr.bf16.mxu0 0
    %336 = vmatpush1.bf16.msra.mxu0 %v297
    %337 = vmatprep.subr.bf16.mxu0 0
    %338 = vmatpush1.bf16.msra.mxu0 %v298
    %339 = vmatprep.subr.bf16.mxu0 0
    %340 = vmatpush1.bf16.msra.mxu0 %v299
    %341 = vmatprep.subr.bf16.mxu0 0
    %342 = vmatpush1.bf16.msra.mxu0 %v300
    %343 = vmatprep.subr.bf16.mxu0 0
    %344 = vmatpush1.bf16.msra.mxu0 %v301
    %345 = vmatprep.subr.bf16.mxu0 0
    %346 = vmatpush1.bf16.msra.mxu0 %v302
    %347 = vmatprep.subr.bf16.mxu0 0
    %348 = vmatpush1.bf16.msra.mxu0 %v303
    %349 = vmatprep.subr.bf16.mxu0 0
    %350 = vmatpush1.bf16.msra.mxu0 %v304
    %351 = vmatprep.subr.bf16.mxu0 0
    %352 = vmatpush1.bf16.msra.mxu0 %v305
    %353 = vmatprep.subr.bf16.mxu0 0
    %354 = vmatpush1.bf16.msra.mxu0 %v306
    %355 = vmatprep.mubr.bf16.mxu0 %v194
    %356 = vmatmul.mubr.bf16.gmra.mrb[0].mxu0 %v193
    %v357 = vpop.f32.mrb[0].mxu0
    %v358 = vadd.f32 0.0, %v357
    %v359 = vpop.f32.mrb[0].mxu0
    %v360 = vpop.f32.mrb[0].mxu0
    %v361 = vadd.f32 0.0, %v360
    %v362 = vpop.f32.mrb[0].mxu0
    %363 = vdwg.mxu0
    %v364 = vadd.f32 %v191, %v358
    %v365 = vadd.f32 %v192, %v361
    %366 = vst [vmem:[#allocation2] sm:$0xff] %v364
    %367 = vst [vmem:[#allocation2 + $0x8] sm:$0xff] %v365
    // Predicated region
    $region26: #{positionwise_ffn.1} parent=1 // pred_check
      %p368 = pneg %p22
    $region27: #{positionwise_ffn.1} parent=1 // pred_check_branch
      %370 = sbr.rel (%p368) target = $region29
    $region28: #{positionwise_ffn.1} parent=1 // pred_region
      %v371 = vld [vmem:[#allocation2] sm:$0xff]
      %v372 = vld [vmem:[#allocation2 + $0x8] sm:$0xff]
      %v373 = vld [vmem:[%s4] sm:$0x1]
      %v375 = vlaneseq
      %v376 = vshrl.u32 %v375, 7
      %v377 = vsub.s32 0, %v376
      %v378 = vrot.slane %v373, %v377
      %v380 = vadd.f32 %v371, %v378
      %v381 = vadd.f32 %v372, %v378
      %382 = vst [vmem:[#allocation3] sm:$0xff] %v380
      %383 = vst [vmem:[#allocation3 + $0x8] sm:$0xff] %v381
    $region29: #{positionwise_ffn.1} parent=1 // pred_fallthru
      _
    // Predicated region
    $region30: #{positionwise_ffn.1} parent=1 // pred_check
      _
    $region31: #{positionwise_ffn.1} parent=1 // pred_check_branch
      %385 = sbr.rel (0) target = $region33
    $region32: #{positionwise_ffn.1} parent=1 // pred_region
      %s387 = ssub.s32 256, 256
      %388 = vsyncadd [#allocation4], %s387
      %s389 = sshll.u32 [#allocation3], 4
      %s390 = int_to_ptr.vmem [resolvable:$true] %s389
      %395 = dma.vmem_to_hbm [thread:$0]  %s390, 256, %s5, [#allocation4], 128, 128, 8
    $region33: #{positionwise_ffn.1} parent=1 // pred_fallthru
      _
    // Predicated region
    $region34: #{positionwise_ffn.1} parent=1 // pred_check
      _
    $region35: #{positionwise_ffn.1} parent=1 // pred_check_branch
      %397 = sbr.rel (0) target = $region37
    $region36: #{positionwise_ffn.1} parent=1 // pred_region
      %398 = dma.done [#allocation4], 256
    $region37: #{positionwise_ffn.1} parent=1 // pred_fallthru
      _
    %399 = vsyncpa [#allocation4], 1

</llo_original>
